<compile_context>
chip_gen: v7x
topology: tpu7x:2x2x1
jax: 0.10.0
libtpu: 0.0.40
codegen_flags: <defaults>
</compile_context>

<pallas_src>
import functools
import math

import jax
import jax.numpy as jnp
from jax.experimental import pallas as pl
from jax.experimental.pallas import tpu as pltpu

_LANE = 128
_MAX_G_RAW_BYTES = 2 * 1024 * 1024   # max raw bytes for resident g + g_t (f32)


def _round_up(n, m):
    return ((n + m - 1) // m) * m


def _sublane_min(dtype):
    return {4: 8, 2: 16, 1: 32}.get(jnp.dtype(dtype).itemsize, 8)


def _tpu_vmem_bytes():
    try:
        return int(pltpu.get_tpu_info().vmem_capacity_bytes)
    except Exception:
        return 64 * 1024 * 1024   # conservative default: assume v7x-sized VMEM


def _ln_kernel_rowsum(x_ref, o_ref, *, eps):
    # Lane-aligned (or unpacked fallback) path: one block row == one logical row.
    x = x_ref[...]
    xf = x.astype(jnp.float32)                                   # reduce in f32
    sumsq = jnp.sum(xf * xf, axis=-1, keepdims=True)             # (tile, 1)
    inv = pl.reciprocal(jnp.sqrt(sumsq) + eps, approx=True)      # EUP slot
    o_ref[...] = (xf * inv).astype(o_ref.dtype)                  # single cast at store


def _ln_kernel_packed(x_ref, g_ref, gt_ref, o_ref, *, eps):
    # Packed path: each block row is a slab of `pack` logical rows; the per-row
    # sum-of-squares is a grouped reduction via two small matmuls against the
    # (resident) 0/1 group-membership matrices.  Both matmuls are per-slab-row,
    # so garbage rows of a ragged last block never contaminate real rows.
    # NOTE: with eps == 0 an all-zero logical row would make inv_g Inf and the
    # inv_g @ g_t broadcast would NaN its whole slab row; with the module's
    # default eps=1e-7 inv_g stays finite (~1e7), matching PyTorch semantics.
    x = x_ref[...]
    xf = x.astype(jnp.float32)
    sumsq_g = jnp.dot(xf * xf, g_ref[...],
                      preferred_element_type=jnp.float32)        # (tile, pack)
    inv_g = pl.reciprocal(jnp.sqrt(sumsq_g) + eps, approx=True)  # (tile, pack)
    inv = jnp.dot(inv_g, gt_ref[...],
                  preferred_element_type=jnp.float32)            # (tile, slab)
    o_ref[...] = (xf * inv).astype(o_ref.dtype)


def simplified_layer_norm(x, *, eps=1e-7):
    """x / (||x||_2(axis=-1) + eps), matching the PyTorch SimplifiedLayerNorm."""
    orig_shape = x.shape
    d = orig_shape[-1]
    x2d = x.reshape(-1, d)
    rows = x2d.shape[0]

    dtype = x.dtype
    itemsize = jnp.dtype(dtype).itemsize
    sub = _sublane_min(dtype)

    # Pack rows so the lane (last) dim of each block is a multiple of 128
    # (lane-dense, unmasked stores).  pack == 1 when d is already 128-aligned.
    pack = _LANE // math.gcd(d, _LANE)
    g_raw = 2 * pack * pack * d * 4            # raw f32 bytes of g + g_t
    use_pack = pack > 1 and g_raw <= _MAX_G_RAW_BYTES

    padded = False
    if use_pack:
        slab = pack * d
        if rows % pack != 0:
            # Rare path (d % 128 != 0 AND rows % pack != 0): pad by < pack rows
            # so the free reshape into slabs is legal.  Zero rows are harmless.
            x2d = jnp.pad(x2d, ((0, _round_up(rows, pack) - rows), (0, 0)))
            padded = True
        rows_grid = x2d.shape[0] // pack
        x_in = x2d.reshape(rows_grid, slab)    # free (contiguous) reshape
    else:
        slab = d                               # lane dim == full array dim (allowed)
        rows_grid = rows
        x_in = x2d

    # Generation-aware VMEM budgets (query physical VMEM, default to v7x).
    vmem_cap = _tpu_vmem_bytes()
    if vmem_cap >= 128 * 1024 * 1024:          # v5e / v6e: 128 MiB physical VMEM
        live_budget = 64 * 1024 * 1024
        vmem_limit = 100 * 1024 * 1024
        max_block_bytes = 16 * 1024 * 1024
    else:                                      # v7x: 64 MiB physical VMEM
        live_budget = 24 * 1024 * 1024
        vmem_limit = 48 * 1024 * 1024
        max_block_bytes = 8 * 1024 * 1024
    if use_pack:
        live_budget -= 2 * g_raw               # resident (double-buffered) g / g_t

    # Row tile: sized by live-bytes budget (double-buffered in/out + ~2 f32 temps)
    # and a per-block-bytes target; kept a multiple of the dtype's sublane minimum
    # and clamped so the grid keeps >= ~4 steps (>= 2 per v7x TensorCore).
    per_row_in = slab * itemsize
    per_row_live = slab * (4 * itemsize + 8)
    tile = max(sub, min(live_budget // per_row_live, max_block_bytes // per_row_in))
    tile = min(tile, max(sub, pl.cdiv(rows_grid, 4)))
    tile = max(sub, (tile // sub) * sub)
    tile = min(tile, _round_up(rows_grid, sub))
    grid = pl.cdiv(rows_grid, tile)
    # TODO(synk): for very large d (block > VMEM even at `sub` rows) add a second
    # grid axis over d with a pl.when-guarded partial-sum pass.

    if use_pack:
        # Group-membership matrices built once in the wrapper (hoisted out of the
        # grid body); index_map (0, 0) keeps them VMEM-resident across all steps.
        lane_grp = jnp.arange(slab, dtype=jnp.int32) // d
        grp = jnp.arange(pack, dtype=jnp.int32)
        g = (lane_grp[:, None] == grp[None, :]).astype(jnp.float32)    # (slab, pack)
        g_t = (grp[:, None] == lane_grp[None, :]).astype(jnp.float32)  # (pack, slab)
        kernel = functools.partial(_ln_kernel_packed, eps=eps)
        in_specs = [
            pl.BlockSpec((tile, slab), lambda i: (i, 0)),
            pl.BlockSpec((slab, pack), lambda i: (0, 0)),
            pl.BlockSpec((pack, slab), lambda i: (0, 0)),
        ]
        args = (x_in, g, g_t)
    else:
        kernel = functools.partial(_ln_kernel_rowsum, eps=eps)
        in_specs = [pl.BlockSpec((tile, slab), lambda i: (i, 0))]
        args = (x_in,)

    out = pl.pallas_call(
        kernel,
        out_shape=jax.ShapeDtypeStruct((rows_grid, slab), dtype),
        grid_spec=pltpu.PrefetchScalarGridSpec(
            num_scalar_prefetch=0,
            grid=(grid,),
            in_specs=in_specs,
            out_specs=pl.BlockSpec((tile, slab), lambda i: (i, 0)),
        ),
        compiler_params=pltpu.CompilerParams(
            dimension_semantics=("parallel",),
            vmem_limit_bytes=vmem_limit,
        ),
    )(*args)

    if use_pack:
        out = out.reshape(rows_grid * pack, d)
        if padded:
            out = out[:rows]
    return out.reshape(orig_shape)


if __name__ == "__main__":
    key = jax.random.PRNGKey(0)
    k1, k2, k3 = jax.random.split(key, 3)

    eps = 1e-7
    # Module is shape-agnostic; small shapes: (batch, seq, hidden).
    x1 = jax.random.normal(k1, (2, 8, 32), dtype=jnp.float32)    # packed path, rows % pack == 0
    x2 = jax.random.normal(k2, (3, 17, 256), dtype=jnp.float32)  # lane-aligned path, ragged last block
    x3 = jax.random.normal(k3, (5, 7, 32), dtype=jnp.float32)    # packed path, rows % pack != 0

    outs = []
    for x in (x1, x2, x3):
        outs.append(jax.block_until_ready(simplified_layer_norm(x, eps=eps)))

    for x, out in zip((x1, x2, x3), outs):
        ref = x / (jnp.linalg.norm(x, axis=-1, keepdims=True) + eps)
        assert out.shape == x.shape and out.dtype == x.dtype
        assert jnp.allclose(out, ref, atol=1e-3, rtol=1e-3), float(jnp.max(jnp.abs(out - ref)))

    print("KERNEL_OK")
</pallas_src>

<mosaic_0001>
module attributes {stable_mosaic.version = 11 : i64} {
  func.func @_ln_kernel_packed(%arg0: i32, %arg1: memref<8x128xf32, #tpu.memory_space<vmem>>, %arg2: memref<128x4xf32, #tpu.memory_space<vmem>>, %arg3: memref<4x128xf32, #tpu.memory_space<vmem>>, %arg4: memref<8x128xf32, #tpu.memory_space<vmem>>) attributes {dimension_semantics = [#tpu.dimension_semantics<parallel>], iteration_bounds = array<i64: 1>, scalar_prefetch = 0 : i64, scratch_operands = 0 : i64, tpu.core_type = #tpu.core_type<tc>, window_params = [{transform_indices = @transform_0, window_bounds = array<i64: 8, 128>}, {pipeline_mode = #tpu.pipeline_mode<synchronous>, transform_indices = @transform_1, window_bounds = array<i64: 128, 4>}, {pipeline_mode = #tpu.pipeline_mode<synchronous>, transform_indices = @transform_2, window_bounds = array<i64: 4, 128>}, {transform_indices = @transform_3, window_bounds = array<i64: 8, 128>}]} {
    %c0 = arith.constant 0 : index
    %c0_0 = arith.constant 0 : index
    %0 = vector.load %arg1[%c0, %c0_0] : memref<8x128xf32, #tpu.memory_space<vmem>>, vector<8x128xf32>
    %1 = arith.mulf %0, %0 : vector<8x128xf32>
    %c0_1 = arith.constant 0 : index
    %c0_2 = arith.constant 0 : index
    %2 = vector.load %arg2[%c0_1, %c0_2] : memref<128x4xf32, #tpu.memory_space<vmem>>, vector<128x4xf32>
    %cst = arith.constant dense<0.000000e+00> : vector<8x4xf32>
    %3 = tpu.matmul %1, %2, %cst {dimension_numbers = #tpu.dot_dimension_numbers<[1], [0], [0], [1], [0, 0, 1, 1], [], []>} : vector<8x128xf32>, vector<128x4xf32>, vector<8x4xf32> -> vector<8x4xf32>
    %4 = math.sqrt %3 : vector<8x4xf32>
    %cst_3 = arith.constant 1.000000e-07 : f32
    %5 = vector.broadcast %cst_3 : f32 to vector<8x4xf32>
    %6 = arith.addf %4, %5 : vector<8x4xf32>
    %7 = tpu.reciprocal %6 {approx = true} : vector<8x4xf32> -> vector<8x4xf32>
    %c0_4 = arith.constant 0 : index
    %c0_5 = arith.constant 0 : index
    %8 = vector.load %arg3[%c0_4, %c0_5] : memref<4x128xf32, #tpu.memory_space<vmem>>, vector<4x128xf32>
    %cst_6 = arith.constant dense<0.000000e+00> : vector<8x128xf32>
    %9 = tpu.matmul %7, %8, %cst_6 {dimension_numbers = #tpu.dot_dimension_numbers<[1], [0], [0], [1], [0, 0, 1, 1], [], []>} : vector<8x4xf32>, vector<4x128xf32>, vector<8x128xf32> -> vector<8x128xf32>
    %10 = arith.mulf %0, %9 : vector<8x128xf32>
    %c0_7 = arith.constant 0 : index
    %c0_8 = arith.constant 0 : index
    %11 = vector.load %arg4[%c0_7, %c0_8] : memref<8x128xf32, #tpu.memory_space<vmem>>, vector<8x128xf32>
    tpu.vector_store %arg4[%c0_7, %c0_8], %10 {strides = array<i32>} : memref<8x128xf32, #tpu.memory_space<vmem>>, vector<8x128xf32>,
    return
  }
  func.func @transform_0(%arg0: i32) -> (i32, i32) {
    %c0_i32 = arith.constant 0 : i32
    %c0_i32_0 = arith.constant 0 : i32
    return %arg0, %c0_i32 : i32, i32
  }
  func.func @transform_1(%arg0: i32) -> (i32, i32) {
    %c0_i32 = arith.constant 0 : i32
    %c0_i32_0 = arith.constant 0 : i32
    %c0_i32_1 = arith.constant 0 : i32
    return %c0_i32, %c0_i32_0 : i32, i32
  }
  func.func @transform_2(%arg0: i32) -> (i32, i32) {
    %c0_i32 = arith.constant 0 : i32
    %c0_i32_0 = arith.constant 0 : i32
    %c0_i32_1 = arith.constant 0 : i32
    return %c0_i32, %c0_i32_0 : i32, i32
  }
  func.func @transform_3(%arg0: i32) -> (i32, i32) {
    %c0_i32 = arith.constant 0 : i32
    %c0_i32_0 = arith.constant 0 : i32
    return %arg0, %c0_i32 : i32, i32
  }
}

</mosaic_0001>

<llo_original>
// kernel: tpu_custom_call.1
$region0: #{tpu_custom_call.1}
  #allocation0 [shape = 'u32[]', space=smem, size = 0x4, offset = 0x4, fixed_abs, tag = 'smem constant byte address 0x4 - core index']
  #allocation1 [shape = 'u32[144,128]{1,0:T(1,128)}', space=vmem, size = 0x12000, scoped, tag = 'internal scratch']
  %s0 = inlined_call_operand.vmem [shape: f32[4,128], index: 0, kind: input, shape index: {}]
  %s1 = inlined_call_operand.vmem [shape: f32[128,4], index: 1, kind: input, shape index: {}]
  %s2 = inlined_call_operand.vmem [shape: f32[4,128], index: 2, kind: input, shape index: {}]
  %s3 = inlined_call_operand.hbm [shape: f32[4,128], index: 3, kind: output, shape index: {}]
  %s4 = sld [smem:[#allocation0]]
  $region22: #{tpu_custom_call.1} parent=0
    _
  %s6 = ssub.s32 1, %s4
  %s7 = scalar_select 0, %s6, %s4
  $region1: #{tpu_custom_call.1} parent=0
    #allocation2 [shape = 'u8[4096]{0}', space=vmem, size = 0x1000, scoped, tag = 'output window, operand 0, single buffered']
    #allocation3 [shape = 's32[1]{0}', space=sflag, size = 0x4, scoped, tag = 'scoped memory for tpu_custom_call.1']
    %8 = vsyncpa [#allocation3], 0
    // Predicated region
    $region2: #{tpu_custom_call.1} parent=1 // pred_check
      _
    $region3: #{tpu_custom_call.1} parent=1 // pred_check_branch
      %10 = sbr.rel (0) target = $region5
    $region4: #{tpu_custom_call.1} parent=1 // pred_region
      _
    $region5: #{tpu_custom_call.1} parent=1 // pred_fallthru
      _
    // Predicated region
    $region6: #{tpu_custom_call.1} parent=1 // pred_check
      _
    $region7: #{tpu_custom_call.1} parent=1 // pred_check_branch
      %12 = sbr.rel (0) target = $region9
    $region8: #{tpu_custom_call.1} parent=1 // pred_region
      _
    $region9: #{tpu_custom_call.1} parent=1 // pred_fallthru
      _
    // Predicated region
    $region10: #{tpu_custom_call.1} parent=1 // pred_check
      _
    $region11: #{tpu_custom_call.1} parent=1 // pred_check_branch
      %14 = sbr.rel (0) target = $region13
    $region12: #{tpu_custom_call.1} parent=1 // pred_region
      _
    $region13: #{tpu_custom_call.1} parent=1 // pred_fallthru
      _
    %v15 = vld [vmem:[%s0] sm:$0xff]
    %v16 = vmul.f32 %v15, %v15
    %v17 = vld [vmem:[%s1] sm:$0xff]
    %v18 = vld [vmem:[%s1 + $0x8] sm:$0xff]
    %v19 = vld [vmem:[%s1 + $0x10] sm:$0xff]
    %v20 = vld [vmem:[%s1 + $0x18] sm:$0xff]
    %v21 = vld [vmem:[%s1 + $0x20] sm:$0xff]
    %v22 = vld [vmem:[%s1 + $0x28] sm:$0xff]
    %v23 = vld [vmem:[%s1 + $0x30] sm:$0xff]
    %v24 = vld [vmem:[%s1 + $0x38] sm:$0xff]
    %v25 = vld [vmem:[%s1 + $0x40] sm:$0xff]
    %v26 = vld [vmem:[%s1 + $0x48] sm:$0xff]
    %v27 = vld [vmem:[%s1 + $0x50] sm:$0xff]
    %v28 = vld [vmem:[%s1 + $0x58] sm:$0xff]
    %v29 = vld [vmem:[%s1 + $0x60] sm:$0xff]
    %v30 = vld [vmem:[%s1 + $0x68] sm:$0xff]
    %v31 = vld [vmem:[%s1 + $0x70] sm:$0xff]
    %v32 = vld [vmem:[%s1 + $0x78] sm:$0xff]
    %33 = vmatprep.subr.mxu0 0.0
    %34 = vmatpush1.msra.mxu0 %v17
    %35 = vmatprep.subr.mxu0 0.0
    %36 = vmatpush1.msra.mxu0 %v18
    %37 = vmatprep.subr.mxu0 0.0
    %38 = vmatpush1.msra.mxu0 %v19
    %39 = vmatprep.subr.mxu0 0.0
    %40 = vmatpush1.msra.mxu0 %v20
    %41 = vmatprep.subr.mxu0 0.0
    %42 = vmatpush1.msra.mxu0 %v21
    %43 = vmatprep.subr.mxu0 0.0
    %44 = vmatpush1.msra.mxu0 %v22
    %45 = vmatprep.subr.mxu0 0.0
    %46 = vmatpush1.msra.mxu0 %v23
    %47 = vmatprep.subr.mxu0 0.0
    %48 = vmatpush1.msra.mxu0 %v24
    %49 = vmatprep.subr.mxu0 0.0
    %50 = vmatpush1.msra.mxu0 %v25
    %51 = vmatprep.subr.mxu0 0.0
    %52 = vmatpush1.msra.mxu0 %v26
    %53 = vmatprep.subr.mxu0 0.0
    %54 = vmatpush1.msra.mxu0 %v27
    %55 = vmatprep.subr.mxu0 0.0
    %56 = vmatpush1.msra.mxu0 %v28
    %57 = vmatprep.subr.mxu0 0.0
    %58 = vmatpush1.msra.mxu0 %v29
    %59 = vmatprep.subr.mxu0 0.0
    %60 = vmatpush1.msra.mxu0 %v30
    %61 = vmatprep.subr.mxu0 0.0
    %62 = vmatpush1.msra.mxu0 %v31
    %63 = vmatprep.subr.mxu0 0.0
    %64 = vmatpush1.msra.mxu0 %v32
    %65 = vmatprep.subr.mxu0 0.0
    %66 = vmatpush1.msra.mxu0 0.0
    %67 = vmatprep.subr.mxu0 0.0
    %68 = vmatpush1.msra.mxu0 0.0
    %69 = vmatprep.subr.mxu0 0.0
    %70 = vmatpush1.msra.mxu0 0.0
    %71 = vmatprep.subr.mxu0 0.0
    %72 = vmatpush1.msra.mxu0 0.0
    %73 = vmatprep.subr.mxu0 0.0
    %74 = vmatpush1.msra.mxu0 0.0
    %75 = vmatprep.subr.mxu0 0.0
    %76 = vmatpush1.msra.mxu0 0.0
    %77 = vmatprep.subr.mxu0 0.0
    %78 = vmatpush1.msra.mxu0 0.0
    %79 = vmatprep.subr.mxu0 0.0
    %80 = vmatpush1.msra.mxu0 0.0
    %81 = vmatprep.subr.mxu0 0.0
    %82 = vmatpush1.msra.mxu0 0.0
    %83 = vmatprep.subr.mxu0 0.0
    %84 = vmatpush1.msra.mxu0 0.0
    %85 = vmatprep.subr.mxu0 0.0
    %86 = vmatpush1.msra.mxu0 0.0
    %87 = vmatprep.subr.mxu0 0.0
    %88 = vmatpush1.msra.mxu0 0.0
    %89 = vmatprep.subr.mxu0 0.0
    %90 = vmatpush1.msra.mxu0 0.0
    %91 = vmatprep.subr.mxu0 0.0
    %92 = vmatpush1.msra.mxu0 0.0
    %93 = vmatprep.subr.mxu0 0.0
    %94 = vmatpush1.msra.mxu0 0.0
    %95 = vmatprep.subr.mxu0 0.0
    %96 = vmatpush1.msra.mxu0 0.0
    %97 = vmatprep.mubr.f32.mxu0 0.0
    %98 = vmatmul.mubr.f32.gmra.mrb[0].mxu0 %v16
    %v99 = vpop.f32.mrb[0].mxu0
    %v100 = vadd.f32 0.0, %v99
    %v101 = vpop.f32.mrb[0].mxu0
    %102 = vdwg.mxu0
    %v103 = vrsqrt.pop %v100
    %v104 = vmul.f32 %v100, %v103
    %vm105 = vcmp.eq.f32.partialorder %v100, inf
    %v106 = vsel %vm105, %v100, %v104
    %vm107 = vcmp.eq.f32.partialorder %v100, 0.0
    %v108 = vand.u32 %v100, 2147483648
    %v109 = vsel %vm107, %v108, %v106
    %v110 = vadd.f32 %v109, 1e-07
    %v111 = vrcp.pop %v110
    %v112 = vld [vmem:[%s2] sm:$0xf]
    %vm113 = vcmask 31744
    %v115 = vsel %vm113, %v111, 0
    %vm117 = vcmask 1043456
    %v119 = vsel %vm117, %v112, 0
    %121 = vmatprep.subr.mxu0 0.0
    %122 = vmatpush1.msra.mxu0 %v119
    %123 = vmatprep.subr.mxu0 0.0
    %124 = vmatpush1.msra.mxu0 0.0
    %125 = vmatprep.subr.mxu0 0.0
    %126 = vmatpush1.msra.mxu0 0.0
    %127 = vmatprep.subr.mxu0 0.0
    %128 = vmatpush1.msra.mxu0 0.0
    %129 = vmatprep.subr.mxu0 0.0
    %130 = vmatpush1.msra.mxu0 0.0
    %131 = vmatprep.subr.mxu0 0.0
    %132 = vmatpush1.msra.mxu0 0.0
    %133 = vmatprep.subr.mxu0 0.0
    %134 = vmatpush1.msra.mxu0 0.0
    %135 = vmatprep.subr.mxu0 0.0
    %136 = vmatpush1.msra.mxu0 0.0
    %137 = vmatprep.subr.mxu0 0.0
    %138 = vmatpush1.msra.mxu0 0.0
    %139 = vmatprep.subr.mxu0 0.0
    %140 = vmatpush1.msra.mxu0 0.0
    %141 = vmatprep.subr.mxu0 0.0
    %142 = vmatpush1.msra.mxu0 0.0
    %143 = vmatprep.subr.mxu0 0.0
    %144 = vmatpush1.msra.mxu0 0.0
    %145 = vmatprep.subr.mxu0 0.0
    %146 = vmatpush1.msra.mxu0 0.0
    %147 = vmatprep.subr.mxu0 0.0
    %148 = vmatpush1.msra.mxu0 0.0
    %149 = vmatprep.subr.mxu0 0.0
    %150 = vmatpush1.msra.mxu0 0.0
    %151 = vmatprep.subr.mxu0 0.0
    %152 = vmatpush1.msra.mxu0 0.0
    %153 = vmatprep.subr.mxu0 0.0
    %154 = vmatpush1.msra.mxu0 0.0
    %155 = vmatprep.subr.mxu0 0.0
    %156 = vmatpush1.msra.mxu0 0.0
    %157 = vmatprep.subr.mxu0 0.0
    %158 = vmatpush1.msra.mxu0 0.0
    %159 = vmatprep.subr.mxu0 0.0
    %160 = vmatpush1.msra.mxu0 0.0
    %161 = vmatprep.subr.mxu0 0.0
    %162 = vmatpush1.msra.mxu0 0.0
    %163 = vmatprep.subr.mxu0 0.0
    %164 = vmatpush1.msra.mxu0 0.0
    %165 = vmatprep.subr.mxu0 0.0
    %166 = vmatpush1.msra.mxu0 0.0
    %167 = vmatprep.subr.mxu0 0.0
    %168 = vmatpush1.msra.mxu0 0.0
    %169 = vmatprep.subr.mxu0 0.0
    %170 = vmatpush1.msra.mxu0 0.0
    %171 = vmatprep.subr.mxu0 0.0
    %172 = vmatpush1.msra.mxu0 0.0
    %173 = vmatprep.subr.mxu0 0.0
    %174 = vmatpush1.msra.mxu0 0.0
    %175 = vmatprep.subr.mxu0 0.0
    %176 = vmatpush1.msra.mxu0 0.0
    %177 = vmatprep.subr.mxu0 0.0
    %178 = vmatpush1.msra.mxu0 0.0
    %179 = vmatprep.subr.mxu0 0.0
    %180 = vmatpush1.msra.mxu0 0.0
    %181 = vmatprep.subr.mxu0 0.0
    %182 = vmatpush1.msra.mxu0 0.0
    %183 = vmatprep.subr.mxu0 0.0
    %184 = vmatpush1.msra.mxu0 0.0
    %185 = vmatprep.mubr.f32.mxu0 0.0
    %186 = vmatmul.mubr.f32.gmra.mrb[0].mxu0 %v115
    %v187 = vpop.f32.mrb[0].mxu0
    %v188 = vadd.f32 0.0, %v187
    %v189 = vpop.f32.mrb[0].mxu0
    %190 = vdwg.mxu0
    %v191 = vmul.f32 %v15, %v188
    %192 = vst [vmem:[#allocation2] sm:$0xff] %v191
    // Predicated region
    $region14: #{tpu_custom_call.1} parent=1 // pred_check
      _
    $region15: #{tpu_custom_call.1} parent=1 // pred_check_branch
      %194 = sbr.rel (0) target = $region17
    $region16: #{tpu_custom_call.1} parent=1 // pred_region
      %s196 = ssub.s32 128, 64
      %197 = vsyncadd [#allocation3], %s196
      %s198 = sshll.u32 [#allocation2], 4
      %s199 = int_to_ptr.vmem [resolvable:$true] %s198
      %204 = dma.vmem_to_hbm [thread:$0]  %s199, 64, %s3, [#allocation3], 64, 64, 4
    $region17: #{tpu_custom_call.1} parent=1 // pred_fallthru
      _
    // Predicated region
    $region18: #{tpu_custom_call.1} parent=1 // pred_check
      _
    $region19: #{tpu_custom_call.1} parent=1 // pred_check_branch
      %206 = sbr.rel (0) target = $region21
    $region20: #{tpu_custom_call.1} parent=1 // pred_region
      %207 = dma.done [#allocation3], 128
    $region21: #{tpu_custom_call.1} parent=1 // pred_fallthru
      _
    %208 = vsyncpa [#allocation3], 1

</llo_original>
